<compile_context>
chip_gen: v7x
topology: tpu7x:2x2x1
jax: 0.10.0
libtpu: 0.0.40
codegen_flags: <defaults>
</compile_context>

<pallas_src>
import numpy as np
import jax
import jax.numpy as jnp
from jax.experimental import pallas as pl
from jax.experimental.pallas import tpu as pltpu


def _round_up(v, m):
    return (v + m - 1) // m * m


def _vmem_info():
    """(physical VMEM bytes, pipelined block-footprint budget bytes)."""
    try:
        cap = int(pltpu.get_tpu_info().vmem_capacity_bytes)
    except Exception:                      # query unavailable -> assume smallest (v7x)
        cap = 64 * 1024 * 1024
    # ~1/4 of physical VMEM for the double-buffered block footprint:
    # ~32 MiB on v5e/v6e (128 MiB), ~16 MiB on v7x (64 MiB).
    return cap, max(8 * 1024 * 1024, cap // 4)


def _choose_blocks(B, N_pad, D_pad, S_pad, itemsize, budget):
    """Pick (TB, NT, td, use_n_reduction) so the pipelined footprint <= budget."""
    lane = 128

    def footprint(tb, nt, td, acc):
        x_b = tb * _round_up(nt, 8) * _round_up(td, lane) * itemsize
        o_b = tb * _round_up(S_pad, 8) * _round_up(td, lane) * itemsize
        if acc:   # mask laid out (tb, nt, 1)
            m_b = tb * _round_up(nt, 8) * lane * 4
        else:     # mask laid out (tb, 1, nt)
            m_b = tb * 8 * _round_up(nt, lane) * 4
        i_b = tb * _round_up(S_pad, 8) * lane * 4
        a_b = _round_up(S_pad, 8) * _round_up(td, lane) * 4 if acc else 0
        return 2 * (x_b + o_b + m_b + i_b) + a_b      # double-buffered inputs/outputs

    td_opts = [t for t in range(D_pad, 127, -128) if D_pad % t == 0]
    tb_opts = [t for t in range(B, 0, -1) if B % t == 0]

    # 1) Preferred: full-D, full-N block; as many texts per grid step as fit.
    for tb in tb_opts:
        if footprint(tb, N_pad, D_pad, False) <= budget:
            return tb, N_pad, D_pad, False
    # 2) Full-N, tile the embed dim (lane-dense, multiple of 128).
    for td in td_opts:
        if footprint(1, N_pad, td, False) <= budget:
            return 1, N_pad, td, False
    # 3) Long sequences: tile tokens (inner "arbitrary" axis) + f32 accumulator.
    for td in td_opts:
        nt = _round_up(min(N_pad, 4096), 8)
        while nt > 8 and footprint(1, nt, td, True) > budget:
            nt = _round_up(max(nt // 2, 8), 8)
        if footprint(1, nt, td, True) <= budget and (nt >= 128 or td == 128):
            return 1, nt, td, True
    return 1, 8, 128, True


def _avg_pool_kernel(mask_ref, inv_ref, x_ref, out_ref):
    """Full-token-range segment mean for a (TB texts, one D tile) grid cell.

    mask_ref : (TB, 1, NT) int32  sentence id per token (1-based, 0 = padding)
    inv_ref  : (TB, S, 1)  f32    1 / max(token_count, 1) per candidate sentence
    x_ref    : (TB, NT, td)       token embeddings
    out_ref  : (TB, S, td)        mean embedding per candidate sentence
    """
    S = out_ref.shape[1]
    NT = x_ref.shape[1]
    seg_ids = jax.lax.broadcasted_iota(jnp.int32, (S, NT), 0) + 1        # (S, NT)
    # Exact {0, 1} one-hot in the input dtype -> full-rate MXU operands.
    onehot = (seg_ids[None] == mask_ref[...]).astype(x_ref.dtype)        # (TB, S, NT)
    sums = jnp.einsum('bsn,bnd->bsd', onehot, x_ref[...],
                      preferred_element_type=jnp.float32)                # (TB, S, td)
    out_ref[...] = (sums * inv_ref[...]).astype(out_ref.dtype)


def _avg_pool_nred_kernel(mask_ref, inv_ref, x_ref, out_ref, acc_ref):
    """Token-chunked segment mean (long-sequence path); grid axis 2 is the reduction.

    mask_ref : (1, NT, 1) int32   sentence ids for this token chunk
    inv_ref  : (1, S, 1)  f32
    x_ref    : (1, NT, td)
    out_ref  : (1, S, td)
    acc_ref  : (S, td) f32 VMEM accumulator
    """
    k = pl.program_id(2)

    @pl.when(k == 0)
    def _():
        acc_ref[...] = jnp.zeros_like(acc_ref)

    S = out_ref.shape[1]
    NT = x_ref.shape[1]
    ids_row = jax.lax.broadcasted_iota(jnp.int32, (NT, S), 1) + 1        # (NT, S)
    onehot_t = (mask_ref[0] == ids_row).astype(x_ref.dtype)              # (NT, S)
    # onehot_t^T @ x  (contract over the token axis) -> (S, td), f32 accumulation.
    acc_ref[...] += jax.lax.dot_general(
        onehot_t, x_ref[0],
        dimension_numbers=(((0,), (0,)), ((), ())),
        preferred_element_type=jnp.float32)

    @pl.when(k == pl.num_programs(2) - 1)
    def _():
        out_ref[0] = (acc_ref[...] * inv_ref[0]).astype(out_ref.dtype)


def _segment_mean_pallas(x, mask_np, inv, S_pad, vmem_budget=None):
    """x: (B, N_pad, D_pad) jnp, mask_np: (B, N_pad) numpy int32, inv: (B, S_pad, 1) f32.

    Returns pooled (B, S_pad, D_pad) in x.dtype.
    """
    B, N_pad, D_pad = x.shape
    itemsize = x.dtype.itemsize
    cap, budget = _vmem_info()
    if vmem_budget is not None:
        budget = int(vmem_budget)

    TB, NT, td, use_nred = _choose_blocks(B, N_pad, D_pad, S_pad, itemsize, budget)

    # Make the token axis a multiple of NT (extra tokens keep sentence id 0).
    N_grid = _round_up(N_pad, NT)
    if N_grid != N_pad:
        x = jnp.pad(x, ((0, 0), (0, N_grid - N_pad), (0, 0)))
        mask_np = np.pad(mask_np, ((0, 0), (0, N_grid - N_pad)))

    cost = pl.CostEstimate(
        flops=2 * B * S_pad * N_grid * D_pad,
        transcendentals=0,
        bytes_accessed=(B * (N_grid * D_pad + S_pad * D_pad) * itemsize
                        + B * N_grid * 4 + B * S_pad * 4))
    vmem_limit = int(min(cap * 3 // 4, max(32 * 1024 * 1024, 2 * budget)))

    if not use_nred:
        mask_dev = jnp.asarray(mask_np.reshape(B, 1, N_grid), dtype=jnp.int32)
        grid = (B // TB, D_pad // td)
        return pl.pallas_call(
            _avg_pool_kernel,
            out_shape=jax.ShapeDtypeStruct((B, S_pad, D_pad), x.dtype),
            grid=grid,
            in_specs=[
                # Same block index across the D axis -> mask/inv DMA only when
                # the batch block changes.
                pl.BlockSpec((TB, 1, N_grid), lambda b, j: (b, 0, 0)),
                pl.BlockSpec((TB, S_pad, 1), lambda b, j: (b, 0, 0)),
                pl.BlockSpec((TB, N_grid, td), lambda b, j: (b, 0, j)),
            ],
            out_specs=pl.BlockSpec((TB, S_pad, td), lambda b, j: (b, 0, j)),
            compiler_params=pltpu.CompilerParams(
                dimension_semantics=("parallel", "parallel"),
                vmem_limit_bytes=vmem_limit),
            cost_estimate=cost,
        )(mask_dev, inv, x)

    # Long-sequence path: token axis is an inner reduction axis.
    mask_dev = jnp.asarray(mask_np.reshape(B, N_grid, 1), dtype=jnp.int32)
    grid = (B, D_pad // td, N_grid // NT)
    return pl.pallas_call(
        _avg_pool_nred_kernel,
        out_shape=jax.ShapeDtypeStruct((B, S_pad, D_pad), x.dtype),
        grid=grid,
        in_specs=[
            pl.BlockSpec((1, NT, 1), lambda b, j, k: (b, k, 0)),
            pl.BlockSpec((1, S_pad, 1), lambda b, j, k: (b, 0, 0)),
            pl.BlockSpec((1, NT, td), lambda b, j, k: (b, k, j)),
        ],
        out_specs=pl.BlockSpec((1, S_pad, td), lambda b, j, k: (b, 0, j)),
        scratch_shapes=[pltpu.VMEM((S_pad, td), jnp.float32)],
        compiler_params=pltpu.CompilerParams(
            dimension_semantics=("parallel", "parallel", "arbitrary"),
            vmem_limit_bytes=vmem_limit),
        cost_estimate=cost,
    )(mask_dev, inv, x)


def sentence_gather(x, roi_mask=None, pool="avg", vmem_budget=None):
    """JAX/Pallas equivalent of SentenceGather.forward (pool='avg').

    x        : (B, N, D) array (f32 or bf16)
    roi_mask : optional (B, N) int array of sentence indices (1-based).
               If None, every token belongs to sentence 1 (the PyTorch
               `batch is None` branch).
    Returns a list of length B; element b has shape (num_sentences_b, D).
    """
    assert pool == "avg", "only pool='avg' (the default) is implemented"
    # TODO(synk): 'max' / 'min' / 'attention' pooling variants not implemented.

    B, N, D = x.shape
    # Single host access: the small (B, N) int mask.  max id, counts,
    # reciprocals and keep indices are all cheap numpy on it.
    if roi_mask is None:
        mask_np = np.ones((B, N), dtype=np.int32)
    else:
        mask_np = np.asarray(jax.device_get(roi_mask)).astype(np.int32)

    max_id = int(mask_np.max()) if mask_np.size else 0
    # Round the candidate-sentence count to the packed sublane tile of the
    # output dtype (8 f32 / 16 bf16 / 32 int8): unmasked stores, aligned MXU M.
    sub = {4: 8, 2: 16, 1: 32}.get(int(x.dtype.itemsize), 8)
    S_pad = _round_up(max(max_id, 1), sub)

    ids = np.arange(1, S_pad + 1, dtype=np.int32)
    counts = (mask_np[:, :, None] == ids[None, None, :]).sum(axis=1)     # (B, S_pad)
    inv_np = (1.0 / np.maximum(counts, 1).astype(np.float32))[:, :, None]
    keeps = [np.nonzero(counts[b] > 0)[0].astype(np.int32) for b in range(B)]

    # Pad token / embed axes for clean sublane/lane layout.  Padded tokens get
    # sentence id 0, so they contribute nothing.
    N_pad = _round_up(N, 8)
    D_pad = _round_up(D, 128)
    x_p = x
    if (N_pad, D_pad) != (N, D):
        x_p = jnp.pad(x, ((0, 0), (0, N_pad - N), (0, D_pad - D)))
    mask_pad = mask_np if N_pad == N else np.pad(mask_np, ((0, 0), (0, N_pad - N)))
    inv = jnp.asarray(inv_np, dtype=jnp.float32)

    pooled = _segment_mean_pallas(x_p, mask_pad, inv, S_pad, vmem_budget)  # (B, S_pad, D_pad)
    pooled = pooled[:, :, :D]

    # Variable-length python list output (matches the PyTorch module); the
    # per-text row gather stays on device.  NOTE: a text whose mask is all-zero
    # yields a (0, D) array where the PyTorch reference would raise.
    return [pooled[b][jnp.asarray(keeps[b])] for b in range(B)]


def _reference(x_np, mask_np):
    """Pure-numpy reference mimicking the PyTorch loops."""
    outs = []
    for b in range(x_np.shape[0]):
        rows = []
        for i in range(int(mask_np[b].max())):
            sel = x_np[b][mask_np[b] == (i + 1)]
            if sel.shape[0] == 0:
                continue
            rows.append(sel.mean(axis=0, keepdims=True))
        outs.append(np.concatenate(rows, axis=0))
    return outs


if __name__ == "__main__":
    key = jax.random.PRNGKey(0)

    # Case 1: batch=None branch -> all-ones mask, one sentence per text.
    B, N, D = 2, 16, 128
    x = jax.random.normal(key, (B, N, D), dtype=jnp.float32)
    outs1 = [jax.block_until_ready(o) for o in sentence_gather(x, roi_mask=None)]
    ref1 = _reference(np.asarray(x), np.ones((B, N), dtype=np.int64))
    assert len(outs1) == B
    for o, r in zip(outs1, ref1):
        assert o.shape == r.shape == (1, D)
        np.testing.assert_allclose(np.asarray(o), r, rtol=1e-5, atol=1e-5)

    # Case 2: explicit sentence_index mask, including an empty sentence id.
    mask = np.zeros((B, N), dtype=np.int32)
    mask[0] = [1] * 5 + [2] * 5 + [3] * 6
    mask[1] = [1] * 8 + [3] * 8          # sentence id 2 is empty -> skipped
    outs2 = [jax.block_until_ready(o)
             for o in sentence_gather(x, roi_mask=jnp.asarray(mask))]
    ref2 = _reference(np.asarray(x), mask)
    assert outs2[0].shape == (3, D) and outs2[1].shape == (2, D)
    for o, r in zip(outs2, ref2):
        np.testing.assert_allclose(np.asarray(o), r, rtol=1e-5, atol=1e-5)

    # Case 3: force the long-sequence (token-chunked, accumulating) path by
    # shrinking the VMEM block budget — validates the N-reduction grid axis.
    B3, N3, D3 = 2, 32, 256
    x3 = jax.random.normal(jax.random.PRNGKey(1), (B3, N3, D3), dtype=jnp.float32)
    mask_c3 = np.zeros((B3, N3), dtype=np.int32)
    mask_c3[0] = [1] * 7 + [2] * 9 + [3] * 16
    mask_c3[1] = [1] * 20 + [4] * 12     # ids 2, 3 empty -> skipped
    outs3 = [jax.block_until_ready(o)
             for o in sentence_gather(x3, roi_mask=jnp.asarray(mask_c3),
                                      vmem_budget=24 * 1024)]
    ref3 = _reference(np.asarray(x3), mask_c3)
    assert outs3[0].shape == (3, D3) and outs3[1].shape == (2, D3)
    for o, r in zip(outs3, ref3):
        np.testing.assert_allclose(np.asarray(o), r, rtol=1e-5, atol=1e-5)

    print("KERNEL_OK")
</pallas_src>

<mosaic_0001>
module attributes {stable_mosaic.version = 11 : i64} {
  func.func @_avg_pool_kernel(%arg0: i32, %arg1: i32, %arg2: memref<2x1x16xi32, #tpu.memory_space<vmem>>, %arg3: memref<2x8x1xf32, #tpu.memory_space<vmem>>, %arg4: memref<2x16x128xf32, #tpu.memory_space<vmem>>, %arg5: memref<2x8x128xf32, #tpu.memory_space<vmem>>) attributes {dimension_semantics = [#tpu.dimension_semantics<parallel>, #tpu.dimension_semantics<parallel>], iteration_bounds = array<i64: 1, 1>, scalar_prefetch = 0 : i64, scratch_operands = 0 : i64, tpu.core_type = #tpu.core_type<tc>, window_params = [{transform_indices = @transform_0, window_bounds = array<i64: 2, 1, 16>}, {transform_indices = @transform_1, window_bounds = array<i64: 2, 8, 1>}, {transform_indices = @transform_2, window_bounds = array<i64: 2, 16, 128>}, {transform_indices = @transform_3, window_bounds = array<i64: 2, 8, 128>}]} {
    %0 = tpu.iota {dimensions = array<i32: 0>} : vector<8x16xi32>
    %c1_i32 = arith.constant 1 : i32
    %1 = vector.broadcast %c1_i32 : i32 to vector<8x16xi32>
    %2 = arith.addi %0, %1 : vector<8x16xi32>
    %3 = vector.shape_cast %2 : vector<8x16xi32> to vector<1x8x16xi32>
    %c0 = arith.constant 0 : index
    %c0_0 = arith.constant 0 : index
    %c0_1 = arith.constant 0 : index
    %4 = vector.load %arg2[%c0, %c0_0, %c0_1] : memref<2x1x16xi32, #tpu.memory_space<vmem>>, vector<2x1x16xi32>
    %5 = vector.broadcast %3 : vector<1x8x16xi32> to vector<2x8x16xi32>
    %6 = vector.broadcast %4 : vector<2x1x16xi32> to vector<2x8x16xi32>
    %7 = arith.cmpi eq, %5, %6 : vector<2x8x16xi32>
    %8 = arith.extui %7 : vector<2x8x16xi1> to vector<2x8x16xi32>
    %9 = arith.sitofp %8 : vector<2x8x16xi32> to vector<2x8x16xf32>
    %c0_2 = arith.constant 0 : index
    %c0_3 = arith.constant 0 : index
    %c0_4 = arith.constant 0 : index
    %10 = vector.load %arg4[%c0_2, %c0_3, %c0_4] : memref<2x16x128xf32, #tpu.memory_space<vmem>>, vector<2x16x128xf32>
    "tpu.trace_start"() <{level = 10 : i32, message = "bsn,bnd->bsd"}> : () -> ()
    %cst = arith.constant dense<0.000000e+00> : vector<2x8x128xf32>
    %11 = tpu.matmul %9, %10, %cst {dimension_numbers = #tpu.dot_dimension_numbers<[2], [1], [1], [2], [0, 0, 0, 1, 1, 2], [0], [0]>} : vector<2x8x16xf32>, vector<2x16x128xf32>, vector<2x8x128xf32> -> vector<2x8x128xf32>
    "tpu.trace_stop"() : () -> ()
    %c0_5 = arith.constant 0 : index
    %c0_6 = arith.constant 0 : index
    %c0_7 = arith.constant 0 : index
    %12 = vector.load %arg3[%c0_5, %c0_6, %c0_7] : memref<2x8x1xf32, #tpu.memory_space<vmem>>, vector<2x8x1xf32>
    %13 = vector.broadcast %12 : vector<2x8x1xf32> to vector<2x8x128xf32>
    %14 = arith.mulf %11, %13 : vector<2x8x128xf32>
    %c0_8 = arith.constant 0 : index
    %c0_9 = arith.constant 0 : index
    %c0_10 = arith.constant 0 : index
    %15 = vector.load %arg5[%c0_8, %c0_9, %c0_10] : memref<2x8x128xf32, #tpu.memory_space<vmem>>, vector<2x8x128xf32>
    tpu.vector_store %arg5[%c0_8, %c0_9, %c0_10], %14 {strides = array<i32>} : memref<2x8x128xf32, #tpu.memory_space<vmem>>, vector<2x8x128xf32>,
    return
  }
  func.func @transform_0(%arg0: i32, %arg1: i32) -> (i32, i32, i32) {
    %c0_i32 = arith.constant 0 : i32
    %c0_i32_0 = arith.constant 0 : i32
    %c0_i32_1 = arith.constant 0 : i32
    return %arg0, %c0_i32, %c0_i32_0 : i32, i32, i32
  }
  func.func @transform_1(%arg0: i32, %arg1: i32) -> (i32, i32, i32) {
    %c0_i32 = arith.constant 0 : i32
    %c0_i32_0 = arith.constant 0 : i32
    %c0_i32_1 = arith.constant 0 : i32
    return %arg0, %c0_i32, %c0_i32_0 : i32, i32, i32
  }
  func.func @transform_2(%arg0: i32, %arg1: i32) -> (i32, i32, i32) {
    %c0_i32 = arith.constant 0 : i32
    %c0_i32_0 = arith.constant 0 : i32
    return %arg0, %c0_i32, %arg1 : i32, i32, i32
  }
  func.func @transform_3(%arg0: i32, %arg1: i32) -> (i32, i32, i32) {
    %c0_i32 = arith.constant 0 : i32
    %c0_i32_0 = arith.constant 0 : i32
    return %arg0, %c0_i32, %arg1 : i32, i32, i32
  }
}

</mosaic_0001>

<llo_original>
// kernel: tpu_custom_call.1
$region0: #{tpu_custom_call.1}
  #allocation0 [shape = 'u32[]', space=smem, size = 0x4, offset = 0x4, fixed_abs, tag = 'smem constant byte address 0x4 - core index']
  #allocation1 [shape = 'u32[144,128]{1,0:T(1,128)}', space=vmem, size = 0x12000, scoped, tag = 'internal scratch']
  %s0 = inlined_call_operand.vmem [shape: s32[2,1,16], index: 0, kind: input, shape index: {}]
  %s1 = inlined_call_operand.vmem [shape: f32[2,8,1], index: 1, kind: input, shape index: {}]
  %s2 = inlined_call_operand.hbm [shape: f32[2,16,128], index: 2, kind: input, shape index: {}]
  %s3 = inlined_call_operand.hbm [shape: f32[2,8,128], index: 3, kind: output, shape index: {}]
  %s4 = sld [smem:[#allocation0]]
  $region26: #{tpu_custom_call.1} parent=0
    _
  %s6 = ssub.s32 1, %s4
  %s7 = scalar_select 0, %s6, %s4
  $region1: #{tpu_custom_call.1} parent=0
    #allocation2 [shape = 'u8[16384]{0}', space=vmem, size = 0x4000, scoped, tag = 'input window, operand 2, single buffered']
    #allocation3 [shape = 's32[1]{0}', space=sflag, size = 0x4, scoped, tag = 'scoped memory for tpu_custom_call.1']
    #allocation4 [shape = 's32[1]{0}', space=sflag, size = 0x4, scoped, tag = 'scoped memory for tpu_custom_call.1']
    #allocation5 [shape = 'u8[8192]{0}', space=vmem, size = 0x2000, scoped, tag = 'output window, operand 0, single buffered']
    %8 = vsyncpa [#allocation3], 0
    %9 = vsyncpa [#allocation4], 0
    // Predicated region
    $region2: #{tpu_custom_call.1} parent=1 // pred_check
      _
    $region3: #{tpu_custom_call.1} parent=1 // pred_check_branch
      %11 = sbr.rel (0) target = $region5
    $region4: #{tpu_custom_call.1} parent=1 // pred_region
      _
    $region5: #{tpu_custom_call.1} parent=1 // pred_fallthru
      _
    // Predicated region
    $region6: #{tpu_custom_call.1} parent=1 // pred_check
      _
    $region7: #{tpu_custom_call.1} parent=1 // pred_check_branch
      %13 = sbr.rel (0) target = $region9
    $region8: #{tpu_custom_call.1} parent=1 // pred_region
      _
    $region9: #{tpu_custom_call.1} parent=1 // pred_fallthru
      _
    // Predicated region
    $region10: #{tpu_custom_call.1} parent=1 // pred_check
      _
    $region11: #{tpu_custom_call.1} parent=1 // pred_check_branch
      %15 = sbr.rel (0) target = $region13
    $region12: #{tpu_custom_call.1} parent=1 // pred_region
      %s17 = ssub.s32 512, 512
      %18 = vsyncadd [#allocation3], %s17
      %s19 = sshll.u32 [#allocation2], 4
      %s20 = int_to_ptr.vmem [resolvable:$true] %s19
      %25 = dma.hbm_to_vmem [thread:$0]  %s2, 512, %s20, [#allocation3], 128, 128, 8
    $region13: #{tpu_custom_call.1} parent=1 // pred_fallthru
      _
    // Predicated region
    $region14: #{tpu_custom_call.1} parent=1 // pred_check
      _
    $region15: #{tpu_custom_call.1} parent=1 // pred_check_branch
      %27 = sbr.rel (0) target = $region17
    $region16: #{tpu_custom_call.1} parent=1 // pred_region
      %28 = dma.done [#allocation3], 512
    $region17: #{tpu_custom_call.1} parent=1 // pred_fallthru
      _
    %v29 = vlaneseq
    %v30 = vshrl.u32 %v29, 7
    %v31 = vadd.s32 %v30, 1
    %v32 = vld [vmem:[%s0] sm:$0x1]
    %v33 = vld [vmem:[%s0 + $0x1] sm:$0x1]
    %v34 = vlaneseq
    %v35 = vshrl.u32 %v34, 7
    %v36 = vsub.s32 0, %v35
    %v37 = vrot.slane %v32, %v36
    %v38 = vlaneseq
    %v39 = vshrl.u32 %v38, 7
    %v40 = vsub.s32 0, %v39
    %v41 = vrot.slane %v33, %v40
    %vm42 = vcmp.eq.s32.totalorder %v31, %v37
    %vm43 = vcmp.eq.s32.totalorder %v31, %v41
    %v44 = vsel %vm42, 1, 0
    %v45 = vsel %vm43, 1, 0
    %v46 = vcvt.s32.f32 %v44
    %v47 = vcvt.s32.f32 %v45
    %v48 = vld [vmem:[#allocation2] sm:$0xff]
    %v49 = vld [vmem:[#allocation2 + $0x8] sm:$0xff]
    %v50 = vld [vmem:[#allocation2 + $0x10] sm:$0xff]
    %v51 = vld [vmem:[#allocation2 + $0x18] sm:$0xff]
    %vm52 = vcmask 130048
    %v54 = vsel %vm52, %v46, 0
    %56 = vmatprep.subr.mxu0 0.0
    %57 = vmatpush1.msra.mxu0 %v48
    %58 = vmatprep.subr.mxu0 0.0
    %59 = vmatpush1.msra.mxu0 %v49
    %60 = vmatprep.subr.mxu0 0.0
    %61 = vmatpush1.msra.mxu0 0.0
    %62 = vmatprep.subr.mxu0 0.0
    %63 = vmatpush1.msra.mxu0 0.0
    %64 = vmatprep.subr.mxu0 0.0
    %65 = vmatpush1.msra.mxu0 0.0
    %66 = vmatprep.subr.mxu0 0.0
    %67 = vmatpush1.msra.mxu0 0.0
    %68 = vmatprep.subr.mxu0 0.0
    %69 = vmatpush1.msra.mxu0 0.0
    %70 = vmatprep.subr.mxu0 0.0
    %71 = vmatpush1.msra.mxu0 0.0
    %72 = vmatprep.subr.mxu0 0.0
    %73 = vmatpush1.msra.mxu0 0.0
    %74 = vmatprep.subr.mxu0 0.0
    %75 = vmatpush1.msra.mxu0 0.0
    %76 = vmatprep.subr.mxu0 0.0
    %77 = vmatpush1.msra.mxu0 0.0
    %78 = vmatprep.subr.mxu0 0.0
    %79 = vmatpush1.msra.mxu0 0.0
    %80 = vmatprep.subr.mxu0 0.0
    %81 = vmatpush1.msra.mxu0 0.0
    %82 = vmatprep.subr.mxu0 0.0
    %83 = vmatpush1.msra.mxu0 0.0
    %84 = vmatprep.subr.mxu0 0.0
    %85 = vmatpush1.msra.mxu0 0.0
    %86 = vmatprep.subr.mxu0 0.0
    %87 = vmatpush1.msra.mxu0 0.0
    %88 = vmatprep.subr.mxu0 0.0
    %89 = vmatpush1.msra.mxu0 0.0
    %90 = vmatprep.subr.mxu0 0.0
    %91 = vmatpush1.msra.mxu0 0.0
    %92 = vmatprep.subr.mxu0 0.0
    %93 = vmatpush1.msra.mxu0 0.0
    %94 = vmatprep.subr.mxu0 0.0
    %95 = vmatpush1.msra.mxu0 0.0
    %96 = vmatprep.subr.mxu0 0.0
    %97 = vmatpush1.msra.mxu0 0.0
    %98 = vmatprep.subr.mxu0 0.0
    %99 = vmatpush1.msra.mxu0 0.0
    %100 = vmatprep.subr.mxu0 0.0
    %101 = vmatpush1.msra.mxu0 0.0
    %102 = vmatprep.subr.mxu0 0.0
    %103 = vmatpush1.msra.mxu0 0.0
    %104 = vmatprep.subr.mxu0 0.0
    %105 = vmatpush1.msra.mxu0 0.0
    %106 = vmatprep.subr.mxu0 0.0
    %107 = vmatpush1.msra.mxu0 0.0
    %108 = vmatprep.subr.mxu0 0.0
    %109 = vmatpush1.msra.mxu0 0.0
    %110 = vmatprep.subr.mxu0 0.0
    %111 = vmatpush1.msra.mxu0 0.0
    %112 = vmatprep.subr.mxu0 0.0
    %113 = vmatpush1.msra.mxu0 0.0
    %114 = vmatprep.subr.mxu0 0.0
    %115 = vmatpush1.msra.mxu0 0.0
    %116 = vmatprep.subr.mxu0 0.0
    %117 = vmatpush1.msra.mxu0 0.0
    %118 = vmatprep.subr.mxu0 0.0
    %119 = vmatpush1.msra.mxu0 0.0
    %120 = vmatprep.mubr.f32.mxu0 0.0
    %121 = vmatmul.mubr.f32.gmra.mrb[0].mxu0 %v54
    %v122 = vpop.f32.mrb[0].mxu0
    %v123 = vadd.f32 0.0, %v122
    %v124 = vpop.f32.mrb[0].mxu0
    %125 = vdwg.mxu0
    %v127 = vsel %vm52, %v47, 0
    %129 = vmatprep.subr.mxu0 0.0
    %130 = vmatpush1.msra.mxu0 %v50
    %131 = vmatprep.subr.mxu0 0.0
    %132 = vmatpush1.msra.mxu0 %v51
    %133 = vmatprep.subr.mxu0 0.0
    %134 = vmatpush1.msra.mxu0 0.0
    %135 = vmatprep.subr.mxu0 0.0
    %136 = vmatpush1.msra.mxu0 0.0
    %137 = vmatprep.subr.mxu0 0.0
    %138 = vmatpush1.msra.mxu0 0.0
    %139 = vmatprep.subr.mxu0 0.0
    %140 = vmatpush1.msra.mxu0 0.0
    %141 = vmatprep.subr.mxu0 0.0
    %142 = vmatpush1.msra.mxu0 0.0
    %143 = vmatprep.subr.mxu0 0.0
    %144 = vmatpush1.msra.mxu0 0.0
    %145 = vmatprep.subr.mxu0 0.0
    %146 = vmatpush1.msra.mxu0 0.0
    %147 = vmatprep.subr.mxu0 0.0
    %148 = vmatpush1.msra.mxu0 0.0
    %149 = vmatprep.subr.mxu0 0.0
    %150 = vmatpush1.msra.mxu0 0.0
    %151 = vmatprep.subr.mxu0 0.0
    %152 = vmatpush1.msra.mxu0 0.0
    %153 = vmatprep.subr.mxu0 0.0
    %154 = vmatpush1.msra.mxu0 0.0
    %155 = vmatprep.subr.mxu0 0.0
    %156 = vmatpush1.msra.mxu0 0.0
    %157 = vmatprep.subr.mxu0 0.0
    %158 = vmatpush1.msra.mxu0 0.0
    %159 = vmatprep.subr.mxu0 0.0
    %160 = vmatpush1.msra.mxu0 0.0
    %161 = vmatprep.subr.mxu0 0.0
    %162 = vmatpush1.msra.mxu0 0.0
    %163 = vmatprep.subr.mxu0 0.0
    %164 = vmatpush1.msra.mxu0 0.0
    %165 = vmatprep.subr.mxu0 0.0
    %166 = vmatpush1.msra.mxu0 0.0
    %167 = vmatprep.subr.mxu0 0.0
    %168 = vmatpush1.msra.mxu0 0.0
    %169 = vmatprep.subr.mxu0 0.0
    %170 = vmatpush1.msra.mxu0 0.0
    %171 = vmatprep.subr.mxu0 0.0
    %172 = vmatpush1.msra.mxu0 0.0
    %173 = vmatprep.subr.mxu0 0.0
    %174 = vmatpush1.msra.mxu0 0.0
    %175 = vmatprep.subr.mxu0 0.0
    %176 = vmatpush1.msra.mxu0 0.0
    %177 = vmatprep.subr.mxu0 0.0
    %178 = vmatpush1.msra.mxu0 0.0
    %179 = vmatprep.subr.mxu0 0.0
    %180 = vmatpush1.msra.mxu0 0.0
    %181 = vmatprep.subr.mxu0 0.0
    %182 = vmatpush1.msra.mxu0 0.0
    %183 = vmatprep.subr.mxu0 0.0
    %184 = vmatpush1.msra.mxu0 0.0
    %185 = vmatprep.subr.mxu0 0.0
    %186 = vmatpush1.msra.mxu0 0.0
    %187 = vmatprep.subr.mxu0 0.0
    %188 = vmatpush1.msra.mxu0 0.0
    %189 = vmatprep.subr.mxu0 0.0
    %190 = vmatpush1.msra.mxu0 0.0
    %191 = vmatprep.subr.mxu0 0.0
    %192 = vmatpush1.msra.mxu0 0.0
    %193 = vmatprep.mubr.f32.mxu0 0.0
    %194 = vmatmul.mubr.f32.gmra.mrb[0].mxu0 %v127
    %v195 = vpop.f32.mrb[0].mxu0
    %v196 = vadd.f32 0.0, %v195
    %v197 = vpop.f32.mrb[0].mxu0
    %198 = vdwg.mxu0
    %v199 = vld [vmem:[%s1] sm:$0xff]
    %v200 = vld [vmem:[%s1 + $0x8] sm:$0xff]
    %202 = vset.pattern.permute.xlu0 0
    %203 = vperm.xlu0 %202, %v199
    %v204 = vpop.permute.xlu0 %203
    %207 = vset.pattern.permute.xlu0 0
    %208 = vperm.xlu0 %207, %v200
    %v209 = vpop.permute.xlu0 %208
    %v211 = vmul.f32 %v123, %v204
    %v212 = vmul.f32 %v196, %v209
    %213 = vst [vmem:[#allocation5] sm:$0xff] %v211
    %214 = vst [vmem:[#allocation5 + $0x8] sm:$0xff] %v212
    // Predicated region
    $region18: #{tpu_custom_call.1} parent=1 // pred_check
      _
    $region19: #{tpu_custom_call.1} parent=1 // pred_check_branch
      %216 = sbr.rel (0) target = $region21
    $region20: #{tpu_custom_call.1} parent=1 // pred_region
      %s218 = ssub.s32 256, 256
      %219 = vsyncadd [#allocation4], %s218
      %s220 = sshll.u32 [#allocation5], 4
      %s221 = int_to_ptr.vmem [resolvable:$true] %s220
      %226 = dma.vmem_to_hbm [thread:$0]  %s221, 256, %s3, [#allocation4], 128, 128, 8
    $region21: #{tpu_custom_call.1} parent=1 // pred_fallthru
      _
    // Predicated region
    $region22: #{tpu_custom_call.1} parent=1 // pred_check
      _
    $region23: #{tpu_custom_call.1} parent=1 // pred_check_branch
      %228 = sbr.rel (0) target = $region25
    $region24: #{tpu_custom_call.1} parent=1 // pred_region
      %229 = dma.done [#allocation4], 256
    $region25: #{tpu_custom_call.1} parent=1 // pred_fallthru
      _
    %230 = vsyncpa [#allocation3], 1
    %231 = vsyncpa [#allocation4], 1

</llo_original>
